<compile_context>
chip_gen: v7x
topology: tpu7x:2x2x1
jax: 0.10.0
libtpu: 0.0.40
codegen_flags: <defaults>
</compile_context>

<pallas_src>
import functools
import math

import numpy as np

import jax
import jax.numpy as jnp
from jax.experimental import pallas as pl
from jax.experimental.pallas import tpu as pltpu

Z_DIM = 64                 # params['z_dim'] in the original script
FLAT = 200 * 8 * 10        # 16000


def _round_up(x, m):
    return ((x + m - 1) // m) * m


def _pad_n(n):
    """Lane-dense output width: pad Cout >= 96 up to a multiple of 128."""
    return n if n <= 64 else _round_up(n, 128)


# ----------------------------------------------------------------------------
# Pallas kernel 1: single-K-block GEMM with fused bias + optional ReLU.
#   A: (P, M, K) bf16   B: (P, K, Np) bf16   bias: (1, Np) f32
#   grid = (P, cdiv(M, tm)); K and Np are full blocks (no reduction axis).
# ----------------------------------------------------------------------------

def _mm_kernel(a_ref, b_ref, bias_ref, o_ref, *, relu):
    acc = jnp.dot(a_ref[0], b_ref[0], preferred_element_type=jnp.float32)
    acc = acc + bias_ref[...]
    if relu:
        acc = jnp.maximum(acc, 0.0)
    o_ref[0] = acc.astype(o_ref.dtype)


def _select_tm(M, K):
    if M <= 1024:
        return _round_up(max(M, 1), 8)
    rows = (4 * 1024 * 1024) // (2 * K)            # ~4 MiB bf16 A tile
    rows = (rows // 256) * 256
    return int(max(256, min(4096, rows)))


@functools.lru_cache(maxsize=None)
def _gemm_call(P, M, K, Np, tm, relu, out_dtype_name):
    out_dtype = jnp.dtype(out_dtype_name)
    grid_m = pl.cdiv(M, tm)
    a_t = tm * K * 2
    b_t = K * Np * 2
    o_t = tm * Np * out_dtype.itemsize
    need = 2 * (a_t + b_t + o_t + Np * 4)          # double-buffered estimate
    vmem_limit = int(min(56 * 2 ** 20, max(32 * 2 ** 20, need + 8 * 2 ** 20)))
    return pl.pallas_call(
        functools.partial(_mm_kernel, relu=relu),
        out_shape=jax.ShapeDtypeStruct((P, M, Np), out_dtype),
        grid_spec=pltpu.PrefetchScalarGridSpec(
            num_scalar_prefetch=0,
            grid=(P, grid_m),
            in_specs=[
                pl.BlockSpec((1, tm, K), lambda p, i: (p, i, 0)),
                pl.BlockSpec((1, K, Np), lambda p, i: (p, 0, 0)),
                pl.BlockSpec((1, Np), lambda p, i: (0, 0)),
            ],
            out_specs=pl.BlockSpec((1, tm, Np), lambda p, i: (p, i, 0)),
        ),
        compiler_params=pltpu.CompilerParams(
            dimension_semantics=("parallel", "parallel"),
            vmem_limit_bytes=vmem_limit),
        cost_estimate=pl.CostEstimate(
            flops=2 * P * M * K * Np,
            transcendentals=0,
            bytes_accessed=2 * P * (M * K + K * Np)
                           + P * M * Np * out_dtype.itemsize),
    )


def matmul_bias_act(a, b, bias, *, relu, out_dtype=jnp.bfloat16):
    """A @ B + bias[N] with optional ReLU; bf16 operands, f32 accumulation."""
    squeeze = a.ndim == 2
    if squeeze:
        a, b = a[None], b[None]
    P, M, K = a.shape
    Np = b.shape[-1]
    tm = _select_tm(M, K)
    Mp = M
    if tm > M:                                     # tiny-M layers only (< 8 rows pad)
        Mp = tm
        a = jnp.pad(a, ((0, 0), (0, Mp - M), (0, 0)))
    out = _gemm_call(P, Mp, K, Np, tm, bool(relu), jnp.dtype(out_dtype).name)(
        a.astype(jnp.bfloat16),
        b.astype(jnp.bfloat16),
        jnp.asarray(bias, jnp.float32).reshape(1, Np))
    if Mp != M:
        out = out[:, :M]
    return out[0] if squeeze else out


# ----------------------------------------------------------------------------
# Pallas kernel 2: MaxPool2d over (H, W, C) activations.
# ----------------------------------------------------------------------------

def _pool_kernel(x_ref, o_ref, *, ph, pw, C):
    v = x_ref[...]                                 # (tr, ph, Wo, pw*C)
    m = v[:, 0, :, 0:C]
    for dy in range(ph):
        for dx in range(pw):
            if dy == 0 and dx == 0:
                continue
            m = jnp.maximum(m, v[:, dy, :, dx * C:(dx + 1) * C])
    o_ref[...] = m


@functools.lru_cache(maxsize=None)
def _pool_call(Ho, Wo, ph, pw, C, dtype_name):
    dtype = jnp.dtype(dtype_name)
    tr = min(Ho, 48)
    return pl.pallas_call(
        functools.partial(_pool_kernel, ph=ph, pw=pw, C=C),
        out_shape=jax.ShapeDtypeStruct((Ho, Wo, C), dtype),
        grid_spec=pltpu.PrefetchScalarGridSpec(
            num_scalar_prefetch=0,
            grid=(pl.cdiv(Ho, tr),),
            in_specs=[pl.BlockSpec((tr, ph, Wo, pw * C),
                                   lambda i: (i, 0, 0, 0))],
            out_specs=pl.BlockSpec((tr, Wo, C), lambda i: (i, 0, 0)),
        ),
        compiler_params=pltpu.CompilerParams(dimension_semantics=("arbitrary",)),
    )


def maxpool2d_hwc(x, pool):
    ph, pw = pool
    H, W, C = x.shape
    Ho, Wo = H // ph, W // pw
    xr = x[:Ho * ph, :Wo * pw, :].reshape(Ho, ph, Wo, pw * C)   # free regroup
    return _pool_call(Ho, Wo, ph, pw, C, x.dtype.name)(xr)


# ----------------------------------------------------------------------------
# Conv2d / ConvTranspose2d wrappers built on the Pallas GEMM.
# TODO(synk): im2col patch extraction is wrapper-side XLA glue, not an
# in-kernel halo-BlockSpec gather.
# ----------------------------------------------------------------------------

def conv2d_gemm(x, w_mat, bias, *, cout, k, s, p, relu, out_dtype=jnp.bfloat16):
    """x: (H, W, Cin); w_mat: (kh*kw*Cin, Np) pre-transposed, N-padded."""
    kh, kw = k
    sh, sw = s
    ph_, pw_ = p
    if ph_ or pw_:
        x = jnp.pad(x, ((ph_, ph_), (pw_, pw_), (0, 0)))
    Hp, Wp, Cin = x.shape
    Ho = (Hp - kh) // sh + 1
    Wo = (Wp - kw) // sw + 1
    views = [x[dy:dy + (Ho - 1) * sh + 1:sh, dx:dx + (Wo - 1) * sw + 1:sw, :]
             for dy in range(kh) for dx in range(kw)]
    patches = jnp.stack(views, axis=2)             # (Ho, Wo, kh*kw, Cin)
    a = patches.reshape(Ho * Wo, kh * kw * Cin)
    y = matmul_bias_act(a, w_mat, bias, relu=relu, out_dtype=out_dtype)
    return y.reshape(Ho, Wo, w_mat.shape[-1])[:, :, :cout]


def _phase_geometry(cfg):
    """Static sub-pixel (phase) decomposition data for a ConvTranspose2d."""
    kh, kw = cfg['k']
    sh, sw = cfg['s']
    ph_, pw_ = cfg['p']
    lead_h, lead_w = kh - 1 - ph_, kw - 1 - pw_
    Mh, Mw = -(-kh // sh), -(-kw // sw)
    offsets, taps = [], []
    for ry in range(sh):
        ay0 = (lead_h - ry) % sh
        dy0 = (ry + ay0 - lead_h) // sh
        for rx in range(sw):
            ax0 = (lead_w - rx) % sw
            dx0 = (rx + ax0 - lead_w) // sw
            offsets.append((dy0, dx0))
            taps.append((ay0, ax0))
    return Mh, Mw, offsets, taps


def conv_transpose_phased(x, w_mats, bias, cfg, *, relu, out_dtype=jnp.bfloat16):
    """All sh*sw phases of one ConvTranspose2d in a single GEMM pallas_call."""
    kh, kw = cfg['k']
    sh, sw = cfg['s']
    ph_, pw_ = cfg['p']
    oph, opw = cfg['op']
    cout = cfg['cout']
    H, W, Cin = x.shape
    Mh, Mw, offsets, _ = _phase_geometry(cfg)
    Ho = (H - 1) * sh - 2 * ph_ + kh + oph
    Wo = (W - 1) * sw - 2 * pw_ + kw + opw
    cnt_h, cnt_w = -(-Ho // sh), -(-Wo // sw)
    dy0s = [o[0] for o in offsets]
    dx0s = [o[1] for o in offsets]
    pad_t = max(0, -min(dy0s))
    pad_l = max(0, -min(dx0s))
    pad_b = max(0, max(dy0s) + cnt_h + Mh - 1 - H)
    pad_r = max(0, max(dx0s) + cnt_w + Mw - 1 - W)
    xp = jnp.pad(x, ((pad_t, pad_b), (pad_l, pad_r), (0, 0)))
    K = Mh * Mw * Cin
    a_list = []
    for dy0, dx0 in offsets:
        y0, x0 = dy0 + pad_t, dx0 + pad_l
        win = xp[y0:y0 + cnt_h + Mh - 1, x0:x0 + cnt_w + Mw - 1, :]
        views = [win[m:m + cnt_h, n:n + cnt_w, :]
                 for m in range(Mh) for n in range(Mw)]
        a_list.append(jnp.stack(views, axis=2).reshape(cnt_h * cnt_w, K))
    a = jnp.stack(a_list, axis=0)                  # (P, cnt_h*cnt_w, K)
    y = matmul_bias_act(a, w_mats, bias, relu=relu, out_dtype=out_dtype)
    Np = w_mats.shape[-1]
    y = y.reshape(sh, sw, cnt_h, cnt_w, Np)
    y = jnp.transpose(y, (2, 0, 3, 1, 4)).reshape(cnt_h * sh, cnt_w * sw, Np)
    return y[:Ho, :Wo, :cout]                      # depth-to-space + crop


# ----------------------------------------------------------------------------
# Model definition (mirrors the PyTorch Autoencoder)
# ----------------------------------------------------------------------------

ENC_CFG = [
    dict(cin=3,   cout=16,  k=(2, 2), s=(1, 1), p=(0, 0)),
    dict(cin=16,  cout=32,  k=(2, 2), s=(1, 1), p=(0, 0)),
    dict(cin=32,  cout=64,  k=(4, 4), s=(1, 1), p=(0, 0)),
    dict(cin=64,  cout=96,  k=(4, 4), s=(1, 1), p=(0, 0)),
    dict(cin=96,  cout=128, k=(5, 5), s=(1, 1), p=(0, 0)),
    dict(cin=128, cout=150, k=(5, 5), s=(2, 2), p=(1, 1)),
    dict(cin=150, cout=200, k=(9, 9), s=(2, 2), p=(0, 0)),
]
ENC_POOL = {1: (2, 3), 3: (2, 2), 5: (2, 2)}   # MaxPool after these convs

DEC_CFG = [
    dict(cin=200, cout=150, k=(4, 4), s=(1, 1), p=(0, 0), op=(0, 0)),
    dict(cin=150, cout=128, k=(5, 5), s=(2, 3), p=(2, 2), op=(0, 2)),
    dict(cin=128, cout=96,  k=(4, 4), s=(2, 2), p=(1, 0), op=(0, 0)),
    dict(cin=96,  cout=64,  k=(8, 8), s=(1, 1), p=(0, 0), op=(0, 0)),
    dict(cin=64,  cout=32,  k=(8, 8), s=(2, 2), p=(2, 1), op=(0, 1)),
    dict(cin=32,  cout=16,  k=(5, 5), s=(2, 2), p=(1, 1), op=(0, 0)),
    dict(cin=16,  cout=3,   k=(5, 5), s=(2, 2), p=(1, 1), op=(1, 1)),
]


def init_params(seed=0, z_dim=Z_DIM):
    key = jax.random.PRNGKey(seed)

    def uni(k, shape, fan_in):
        s = 1.0 / math.sqrt(fan_in)
        return jax.random.uniform(k, shape, jnp.float32, -s, s)

    p = {'enc': [], 'dec': []}
    for cfg in ENC_CFG:
        key, k_w, k_b = jax.random.split(key, 3)
        cin, cout = cfg['cin'], cfg['cout']
        kh, kw = cfg['k']
        fan = cin * kh * kw
        p['enc'].append({'w': uni(k_w, (cout, cin, kh, kw), fan),
                         'b': uni(k_b, (cout,), fan)})
    for cfg in DEC_CFG:
        key, k_w, k_b = jax.random.split(key, 3)
        cin, cout = cfg['cin'], cfg['cout']
        kh, kw = cfg['k']
        fan = cin * kh * kw
        p['dec'].append({'w': uni(k_w, (cin, cout, kh, kw), fan),
                         'b': uni(k_b, (cout,), fan)})
    key, k1, k2, k3, k4 = jax.random.split(key, 5)
    # Linear weights stored as (in, out) so y = x @ W + b  (== torch x @ W.T + b)
    p['fc1'] = {'w': uni(k1, (FLAT, z_dim), FLAT), 'b': uni(k2, (z_dim,), FLAT)}
    p['fc2'] = {'w': uni(k3, (z_dim, FLAT), z_dim), 'b': uni(k4, (FLAT,), z_dim)}
    return p


# ---- one-time conversion of torch-layout params into GEMM-ready arrays -----

def _conv_wmat(w_ochw):
    """torch Conv2d weight (Cout,Cin,kh,kw) -> (kh*kw*Cin, Np) GEMM matrix."""
    cout, cin, kh, kw = w_ochw.shape
    np_ = _pad_n(cout)
    wm = np.transpose(w_ochw, (2, 3, 1, 0)).reshape(kh * kw * cin, cout)
    return np.pad(wm, ((0, 0), (0, np_ - cout)))


def _deconv_phase_wmats(w_iokk, cfg):
    """torch ConvTranspose2d weight (Cin,Cout,kh,kw) -> (P, Mh*Mw*Cin, Np)."""
    cin, cout, kh, kw = w_iokk.shape
    sh, sw = cfg['s']
    Mh, Mw, _, taps = _phase_geometry(cfg)
    np_ = _pad_n(cout)
    mats = []
    for ay0, ax0 in taps:
        wk = np.zeros((Mh, Mw, cin, cout), np.float32)
        for m in range(Mh):
            iy = kh - 1 - ay0 - m * sh
            if iy < 0:
                continue
            for n in range(Mw):
                ix = kw - 1 - ax0 - n * sw
                if ix < 0:
                    continue
                wk[m, n] = w_iokk[:, :, iy, ix]
        mats.append(wk.reshape(Mh * Mw * cin, cout))
    wm = np.stack(mats, axis=0)
    return np.pad(wm, ((0, 0), (0, 0), (0, np_ - cout)))


def prepare_params(p):
    prep = {'enc': [], 'dec': []}
    for i, _ in enumerate(ENC_CFG):
        wm = _conv_wmat(np.asarray(p['enc'][i]['w'], np.float32))
        b = np.asarray(p['enc'][i]['b'], np.float32)
        b = np.pad(b, (0, wm.shape[-1] - b.shape[0]))
        prep['enc'].append({'w': jnp.asarray(wm, jnp.bfloat16),
                            'b': jnp.asarray(b, jnp.float32)})
    for i, cfg in enumerate(DEC_CFG):
        w = np.asarray(p['dec'][i]['w'], np.float32)
        if cfg['s'] == (1, 1):
            # stride-1 deconv == conv with the flipped kernel
            wflip = np.ascontiguousarray(
                np.transpose(w, (1, 0, 2, 3))[:, :, ::-1, ::-1])
            wm = _conv_wmat(wflip)
        else:
            wm = _deconv_phase_wmats(w, cfg)
        b = np.asarray(p['dec'][i]['b'], np.float32)
        b = np.pad(b, (0, wm.shape[-1] - b.shape[0]))
        prep['dec'].append({'w': jnp.asarray(wm, jnp.bfloat16),
                            'b': jnp.asarray(b, jnp.float32)})
    prep['fc1'] = {'w': jnp.asarray(np.asarray(p['fc1']['w']), jnp.bfloat16),
                   'b': jnp.asarray(np.asarray(p['fc1']['b']), jnp.float32)}
    prep['fc2'] = {'w': jnp.asarray(np.asarray(p['fc2']['w']), jnp.bfloat16),
                   'b': jnp.asarray(np.asarray(p['fc2']['b']), jnp.float32)}
    return prep


# ----------------------------------------------------------------------------
# Forward pass (fully jitted; mode static)
# ----------------------------------------------------------------------------

def _encode_one(prep, img_chw):
    h = jnp.transpose(img_chw, (1, 2, 0)).astype(jnp.bfloat16)   # (H, W, 3)
    for i, cfg in enumerate(ENC_CFG):
        lyr = prep['enc'][i]
        h = conv2d_gemm(h, lyr['w'], lyr['b'], cout=cfg['cout'],
                        k=cfg['k'], s=cfg['s'], p=cfg['p'], relu=True)
        if i in ENC_POOL:
            h = maxpool2d_hwc(h, ENC_POOL[i])
    # torch: encoded.view(-1, 200*8*10) flattens in NCHW order
    return jnp.transpose(h, (2, 0, 1)).reshape(FLAT)


def _decode_one(prep, flat_vec):
    h = jnp.transpose(flat_vec.reshape(200, 8, 10), (1, 2, 0))   # (8, 10, 200)
    h = h.astype(jnp.bfloat16)
    for i, cfg in enumerate(DEC_CFG):
        lyr = prep['dec'][i]
        if cfg['s'] == (1, 1):
            kh, kw = cfg['k']
            ph_, pw_ = cfg['p']
            h = conv2d_gemm(h, lyr['w'], lyr['b'], cout=cfg['cout'],
                            k=cfg['k'], s=(1, 1),
                            p=(kh - 1 - ph_, kw - 1 - pw_), relu=True)
        else:
            h = conv_transpose_phased(h, lyr['w'], lyr['b'], cfg, relu=True)
    return jnp.transpose(h, (2, 0, 1))                           # back to CHW


@functools.partial(jax.jit, static_argnames=('mode',))
def forward(prep, x_nchw, z, mode):
    """Mirrors Autoencoder.forward: returns (encoded, decoded)."""
    if mode == 'train':
        flats = jnp.stack([_encode_one(prep, x_nchw[n])
                           for n in range(x_nchw.shape[0])], axis=0)
        encoded = matmul_bias_act(flats, prep['fc1']['w'], prep['fc1']['b'],
                                  relu=False, out_dtype=jnp.float32)
        dec_in = encoded
    elif mode == 'test':
        encoded = jnp.zeros((1,), jnp.float32)
        dec_in = z
    else:
        raise ValueError(f"{mode} is not an adequate in the forward path")
    d = matmul_bias_act(dec_in, prep['fc2']['w'], prep['fc2']['b'],
                        relu=False, out_dtype=jnp.bfloat16)
    decoded = jnp.stack([_decode_one(prep, d[n])
                         for n in range(d.shape[0])], axis=0)
    return encoded, decoded.astype(jnp.float32)


# ----------------------------------------------------------------------------

if __name__ == "__main__":
    key = jax.random.PRNGKey(0)
    kx, kz, ka, kb = jax.random.split(key, 4)

    # Quick numerical sanity check of the fused GEMM kernel (bias + ReLU path).
    at = jax.random.normal(ka, (13, 40), jnp.float32)
    bt = jax.random.normal(kb, (40, 16), jnp.float32)
    bias_t = jnp.linspace(-1.0, 1.0, 16, dtype=jnp.float32)
    got = matmul_bias_act(at, bt, bias_t, relu=True, out_dtype=jnp.float32)
    want = jnp.maximum(
        at.astype(jnp.bfloat16).astype(jnp.float32)
        @ bt.astype(jnp.bfloat16).astype(jnp.float32) + bias_t, 0.0)
    assert bool(jnp.allclose(got, want, atol=3e-2, rtol=3e-2)), "GEMM mismatch"

    # The module hard-codes view(-1, 200*8*10), which pins the encoder input
    # to 404x720; batch=1 is the smallest self-consistent shape.
    x = jax.random.uniform(kx, (1, 3, 404, 720), jnp.float32)
    z = jax.random.normal(kz, (1, Z_DIM), jnp.float32)

    params = init_params(0)
    prep = prepare_params(params)

    enc, dec = forward(prep, x, z, mode='train')
    jax.block_until_ready((enc, dec))
    assert enc.shape == (1, Z_DIM), enc.shape
    assert dec.shape == (1, 3, 404, 720), dec.shape
    assert bool(jnp.isfinite(dec).all()), "non-finite values in decoded output"

    enc_t, dec_t = forward(prep, x, z, mode='test')
    jax.block_until_ready((enc_t, dec_t))
    assert enc_t.shape == (1,), enc_t.shape
    assert dec_t.shape == (1, 3, 404, 720), dec_t.shape

    print("KERNEL_OK")
</pallas_src>

<mosaic_0001>
module attributes {stable_mosaic.version = 11 : i64} {
  func.func @_mm_kernel(%arg0: i32, %arg1: i32, %arg2: memref<1x16x40xbf16, #tpu.memory_space<vmem>>, %arg3: memref<1x40x16xbf16, #tpu.memory_space<vmem>>, %arg4: memref<1x16xf32, #tpu.memory_space<vmem>>, %arg5: memref<1x16x16xf32, #tpu.memory_space<vmem>>) attributes {dimension_semantics = [#tpu.dimension_semantics<parallel>, #tpu.dimension_semantics<parallel>], iteration_bounds = array<i64: 1, 1>, scalar_prefetch = 0 : i64, scratch_operands = 0 : i64, tpu.core_type = #tpu.core_type<tc>, window_params = [{transform_indices = @transform_0, window_bounds = array<i64: 1, 16, 40>}, {transform_indices = @transform_1, window_bounds = array<i64: 1, 40, 16>}, {pipeline_mode = #tpu.pipeline_mode<synchronous>, transform_indices = @transform_2, window_bounds = array<i64: 1, 16>}, {transform_indices = @transform_3, window_bounds = array<i64: 1, 16, 16>}]} {
    %c0 = arith.constant 0 : index
    %c0_0 = arith.constant 0 : index
    %c0_1 = arith.constant 0 : index
    %0 = vector.load %arg2[%c0, %c0_0, %c0_1] : memref<1x16x40xbf16, #tpu.memory_space<vmem>>, vector<1x16x40xbf16>
    %1 = vector.shape_cast %0 : vector<1x16x40xbf16> to vector<16x40xbf16>
    %c0_2 = arith.constant 0 : index
    %c0_3 = arith.constant 0 : index
    %c0_4 = arith.constant 0 : index
    %2 = vector.load %arg3[%c0_2, %c0_3, %c0_4] : memref<1x40x16xbf16, #tpu.memory_space<vmem>>, vector<1x40x16xbf16>
    %3 = vector.shape_cast %2 : vector<1x40x16xbf16> to vector<40x16xbf16>
    %cst = arith.constant dense<0.000000e+00> : vector<16x16xf32>
    %4 = tpu.matmul %1, %3, %cst {dimension_numbers = #tpu.dot_dimension_numbers<[1], [0], [0], [1], [0, 0, 1, 1], [], []>} : vector<16x40xbf16>, vector<40x16xbf16>, vector<16x16xf32> -> vector<16x16xf32>
    %c0_5 = arith.constant 0 : index
    %c0_6 = arith.constant 0 : index
    %5 = vector.load %arg4[%c0_5, %c0_6] : memref<1x16xf32, #tpu.memory_space<vmem>>, vector<1x16xf32>
    %6 = vector.broadcast %5 : vector<1x16xf32> to vector<16x16xf32>
    %7 = arith.addf %4, %6 : vector<16x16xf32>
    %cst_7 = arith.constant 0.000000e+00 : f32
    %8 = vector.broadcast %cst_7 : f32 to vector<16x16xf32>
    %9 = arith.maximumf %7, %8 : vector<16x16xf32>
    %c0_8 = arith.constant 0 : index
    %c0_9 = arith.constant 0 : index
    %c0_10 = arith.constant 0 : index
    %10 = vector.load %arg5[%c0_8, %c0_9, %c0_10] : memref<1x16x16xf32, #tpu.memory_space<vmem>>, vector<1x16x16xf32>
    %11 = vector.shape_cast %10 : vector<1x16x16xf32> to vector<16x16xf32>
    %12 = vector.shape_cast %9 : vector<16x16xf32> to vector<1x16x16xf32>
    tpu.vector_store %arg5[%c0_8, %c0_9, %c0_10], %12 {strides = array<i32>} : memref<1x16x16xf32, #tpu.memory_space<vmem>>, vector<1x16x16xf32>,
    return
  }
  func.func @transform_0(%arg0: i32, %arg1: i32) -> (i32, i32, i32) {
    %c0_i32 = arith.constant 0 : i32
    %c0_i32_0 = arith.constant 0 : i32
    return %arg0, %arg1, %c0_i32 : i32, i32, i32
  }
  func.func @transform_1(%arg0: i32, %arg1: i32) -> (i32, i32, i32) {
    %c0_i32 = arith.constant 0 : i32
    %c0_i32_0 = arith.constant 0 : i32
    %c0_i32_1 = arith.constant 0 : i32
    return %arg0, %c0_i32, %c0_i32_0 : i32, i32, i32
  }
  func.func @transform_2(%arg0: i32, %arg1: i32) -> (i32, i32) {
    %c0_i32 = arith.constant 0 : i32
    %c0_i32_0 = arith.constant 0 : i32
    %c0_i32_1 = arith.constant 0 : i32
    return %c0_i32, %c0_i32_0 : i32, i32
  }
  func.func @transform_3(%arg0: i32, %arg1: i32) -> (i32, i32, i32) {
    %c0_i32 = arith.constant 0 : i32
    %c0_i32_0 = arith.constant 0 : i32
    return %arg0, %arg1, %c0_i32 : i32, i32, i32
  }
}

</mosaic_0001>

<llo_original>
// kernel: tpu_custom_call.1
$region0: #{tpu_custom_call.1}
  #allocation0 [shape = 'u32[]', space=smem, size = 0x4, offset = 0x4, fixed_abs, tag = 'smem constant byte address 0x4 - core index']
  #allocation1 [shape = 'u32[144,128]{1,0:T(1,128)}', space=vmem, size = 0x12000, scoped, tag = 'internal scratch']
  %s0 = inlined_call_operand.vmem [shape: bf16[1,16,40], index: 0, kind: input, shape index: {}]
  %s1 = inlined_call_operand.vmem [shape: bf16[1,40,16], index: 1, kind: input, shape index: {}]
  %s2 = inlined_call_operand.vmem [shape: f32[1,16], index: 2, kind: input, shape index: {}]
  %s3 = inlined_call_operand.hbm [shape: f32[1,16,16], index: 3, kind: output, shape index: {}]
  %s4 = sld [smem:[#allocation0]]
  $region22: #{tpu_custom_call.1} parent=0
    _
  %s6 = ssub.s32 1, %s4
  %s7 = scalar_select 0, %s6, %s4
  $region1: #{tpu_custom_call.1} parent=0
    #allocation2 [shape = 'u8[8192]{0}', space=vmem, size = 0x2000, scoped, tag = 'output window, operand 0, single buffered']
    #allocation3 [shape = 's32[1]{0}', space=sflag, size = 0x4, scoped, tag = 'scoped memory for tpu_custom_call.1']
    %8 = vsyncpa [#allocation3], 0
    // Predicated region
    $region2: #{tpu_custom_call.1} parent=1 // pred_check
      _
    $region3: #{tpu_custom_call.1} parent=1 // pred_check_branch
      %10 = sbr.rel (0) target = $region5
    $region4: #{tpu_custom_call.1} parent=1 // pred_region
      _
    $region5: #{tpu_custom_call.1} parent=1 // pred_fallthru
      _
    // Predicated region
    $region6: #{tpu_custom_call.1} parent=1 // pred_check
      _
    $region7: #{tpu_custom_call.1} parent=1 // pred_check_branch
      %12 = sbr.rel (0) target = $region9
    $region8: #{tpu_custom_call.1} parent=1 // pred_region
      _
    $region9: #{tpu_custom_call.1} parent=1 // pred_fallthru
      _
    // Predicated region
    $region10: #{tpu_custom_call.1} parent=1 // pred_check
      _
    $region11: #{tpu_custom_call.1} parent=1 // pred_check_branch
      %14 = sbr.rel (0) target = $region13
    $region12: #{tpu_custom_call.1} parent=1 // pred_region
      _
    $region13: #{tpu_custom_call.1} parent=1 // pred_fallthru
      _
    %v16 = vld [vmem:[%s0] sm:$0xf]
    %v17 = vld [vmem:[%s0 + $0x4] sm:$0xf]
    %v18 = vld [vmem:[%s1] sm:$0xf]
    %v19 = vld [vmem:[%s1 + $0x4] sm:$0xf]
    %v20 = vld [vmem:[%s1 + $0x8] sm:$0xf]
    %v21 = vld [vmem:[%s1 + $0xc] sm:$0xf]
    %v22 = vld [vmem:[%s1 + $0x10] sm:$0xf]
    %v23 = vld [vmem:[%s2] sm:$0x1]
    %v25 = vlaneseq
    %v26 = vshrl.u32 %v25, 7
    %v27 = vsub.s32 0, %v26
    %v28 = vrot.slane %v23, %v27
    %v32 = vunpack.c.l.b16 %v16
    %v33 = vunpack.c.l.b16 %v17
    %v34 = vpack.c.b16 %v33, %v32
    %v40 = vunpack.c.l.b16 %v18
    %v41 = vunpack.c.l.b16 %v19
    %v42 = vunpack.c.l.b16 %v20
    %v43 = vunpack.c.l.b16 %v21
    %v44 = vunpack.c.l.b16 %v22
    %v45 = vpack.c.b16 %v41, %v40
    %v46 = vpack.c.b16 %v43, %v42
    %v47 = vpack.c.b16 %v44, %v44
    %vm50 = vcmask 326656
    %v52 = vsel %vm50, %v34, 0
    %vm54 = vcmask 1043456
    %v56 = vsel %vm54, %v47, 0
    %58 = vmatprep.subr.bf16.mxu0 0
    %59 = vmatpush1.bf16.msra.mxu0 %v45
    %60 = vmatprep.subr.bf16.mxu0 0
    %61 = vmatpush1.bf16.msra.mxu0 %v46
    %62 = vmatprep.subr.bf16.mxu0 0
    %63 = vmatpush1.bf16.msra.mxu0 %v56
    %64 = vmatprep.subr.bf16.mxu0 0
    %65 = vmatpush1.bf16.msra.mxu0 0
    %66 = vmatprep.subr.bf16.mxu0 0
    %67 = vmatpush1.bf16.msra.mxu0 0
    %68 = vmatprep.subr.bf16.mxu0 0
    %69 = vmatpush1.bf16.msra.mxu0 0
    %70 = vmatprep.subr.bf16.mxu0 0
    %71 = vmatpush1.bf16.msra.mxu0 0
    %72 = vmatprep.subr.bf16.mxu0 0
    %73 = vmatpush1.bf16.msra.mxu0 0
    %74 = vmatprep.subr.bf16.mxu0 0
    %75 = vmatpush1.bf16.msra.mxu0 0
    %76 = vmatprep.subr.bf16.mxu0 0
    %77 = vmatpush1.bf16.msra.mxu0 0
    %78 = vmatprep.subr.bf16.mxu0 0
    %79 = vmatpush1.bf16.msra.mxu0 0
    %80 = vmatprep.subr.bf16.mxu0 0
    %81 = vmatpush1.bf16.msra.mxu0 0
    %82 = vmatprep.subr.bf16.mxu0 0
    %83 = vmatpush1.bf16.msra.mxu0 0
    %84 = vmatprep.subr.bf16.mxu0 0
    %85 = vmatpush1.bf16.msra.mxu0 0
    %86 = vmatprep.subr.bf16.mxu0 0
    %87 = vmatpush1.bf16.msra.mxu0 0
    %88 = vmatprep.subr.bf16.mxu0 0
    %89 = vmatpush1.bf16.msra.mxu0 0
    %90 = vmatprep.mubr.bf16.mxu0 0
    %91 = vmatmul.mubr.bf16.gmra.mrb[0].mxu0 %v52
    %v92 = vpop.f32.mrb[0].mxu0
    %v93 = vadd.f32 %v28, %v92
    %v94 = vpop.f32.mrb[0].mxu0
    %v95 = vpop.f32.mrb[0].mxu0
    %v96 = vadd.f32 %v28, %v95
    %v97 = vpop.f32.mrb[0].mxu0
    %98 = vdwg.mxu0
    %v99 = vmax.f32 %v93, 0.0
    %v100 = vmax.f32 %v96, 0.0
    %vm101 = vcmask 130048
    %102 = vst.msk [vmem:[#allocation2] sm:$0xff] %vm101, %v99
    %103 = vst.msk [vmem:[#allocation2 + $0x8] sm:$0xff] %vm101, %v100
    // Predicated region
    $region14: #{tpu_custom_call.1} parent=1 // pred_check
      _
    $region15: #{tpu_custom_call.1} parent=1 // pred_check_branch
      %105 = sbr.rel (0) target = $region17
    $region16: #{tpu_custom_call.1} parent=1 // pred_region
      %s107 = ssub.s32 256, 256
      %108 = vsyncadd [#allocation3], %s107
      %s109 = sshll.u32 [#allocation2], 4
      %s110 = int_to_ptr.vmem [resolvable:$true] %s109
      %115 = dma.vmem_to_hbm [thread:$0]  %s110, 256, %s3, [#allocation3], 128, 128, 8
    $region17: #{tpu_custom_call.1} parent=1 // pred_fallthru
      _
    // Predicated region
    $region18: #{tpu_custom_call.1} parent=1 // pred_check
      _
    $region19: #{tpu_custom_call.1} parent=1 // pred_check_branch
      %117 = sbr.rel (0) target = $region21
    $region20: #{tpu_custom_call.1} parent=1 // pred_region
      %118 = dma.done [#allocation3], 256
    $region21: #{tpu_custom_call.1} parent=1 // pred_fallthru
      _
    %119 = vsyncpa [#allocation3], 1

</llo_original>
